<compile_context>
chip_gen: v7x
topology: tpu7x:2x2x1
jax: 0.10.0
libtpu: 0.0.40
codegen_flags: <defaults>
</compile_context>

<pallas_src>
import math
from functools import partial

import numpy as np
import jax
import jax.numpy as jnp
from jax.experimental import pallas as pl
from jax.experimental.pallas import tpu as pltpu


# ----------------------------------------------------------------------------
# Fused forward kernel: whole batch, whole network, one invocation
# ----------------------------------------------------------------------------
def _cnn1d_fused_kernel(x_ref, w_ref, o_ref, xfold_ref, flat_ref, *,
                        B, k, blocks, head):
    """
    x_ref    : (B, Cin, T)   input, exactly the PyTorch layout
    w_ref    : (R, W)        all weights / biases / BN affines / column pickers,
                             row-packed at static (8-aligned) offsets
    o_ref    : (B, out_dim)  output of the final Linear
    xfold_ref: (Cin, B*T)    VMEM scratch: batch folded into the column axis
    flat_ref : (B, C3*L3)    VMEM scratch: torch.flatten(x, 1) layout
    """
    def slab(off):                           # static slice of the packed buffer
        r0, nr, nc = off
        return w_ref[r0:r0 + nr, 0:nc]

    # ---- fold the batch into the matmul column axis: col = b*T + t --------
    # (B static stores to VMEM scratch; avoids any in-kernel transpose and
    #  lets every subsequent layer be ONE full-batch matmul.)
    T = x_ref.shape[2]
    for b in range(B):                       # static unroll, B is tiny
        xfold_ref[:, b * T:(b + 1) * T] = x_ref[b].astype(jnp.float32)
    h = xfold_ref[...]                       # (Cin, B*T)

    # ---- 3 x [Conv1x1 + ReLU + Conv_k(valid, stride) + ReLU + BN(eval)] ----
    for blk in blocks:
        w1 = slab(blk["w1"])                 # (cout, cin)
        wk = slab(blk["wk"])                 # (cout, k*cout), tap-major columns
        aff = slab(blk["aff"])               # (cout, 4) = [bias1, biask, scale, shift]
        sel = slab(blk["sel"])               # (B*lin-k+1, B*lout) constant 0/1 picker

        # 1x1 conv + bias + ReLU: one MXU matmul over the whole folded batch.
        y = jnp.dot(w1, h, preferred_element_type=jnp.float32) + aff[:, 0:1]
        y = jnp.maximum(y, 0.0)              # (cout, B*lin)

        # k-tap 'valid' conv: im2col with tap-major rows (sublane concat of
        # contiguous shifted slices only) + ONE MXU matmul over all stride-1
        # positions of the folded batch.
        lf = y.shape[1] - k + 1
        m = jnp.concatenate([y[:, i:i + lf] for i in range(k)], axis=0)
        z = jnp.dot(wk, m, preferred_element_type=jnp.float32)      # (cout, lf)
        # Constant column picker (built at pack time, lives in w_ref): drops
        # windows that straddle a batch boundary AND applies the conv stride
        # in the same tiny matmul -- no strided slices / iota compute here.
        z = jnp.dot(z, sel, preferred_element_type=jnp.float32)     # (cout, B*lout)
        z = jnp.maximum(z + aff[:, 1:2], 0.0)                       # conv bias + ReLU
        h = z * aff[:, 2:3] + aff[:, 3:4]    # BatchNorm(eval) affine; Dropout = id

    # ---- final Linear over torch.flatten(x, 1) -----------------------------
    # flat[b, c*L3 + t] = h[c, b*L3 + t]: realize the flatten with a handful of
    # static VMEM scratch stores so the Linear is ONE MXU matmul (instead of C3
    # tiny pushes) without relying on a general in-kernel relayout reshape.
    c3, l3 = head["c3"], head["l3"]
    for b in range(B):
        for c in range(c3):
            flat_ref[b:b + 1, c * l3:(c + 1) * l3] = h[c:c + 1, b * l3:(b + 1) * l3]
    wl = slab(head["wl"])                    # (c3*l3, out_dim)
    bl = slab(head["bl"])                    # (1, out_dim)
    out = jnp.dot(flat_ref[...], wl, preferred_element_type=jnp.float32) + bl
    o_ref[...] = out.astype(o_ref.dtype)     # single (B, out_dim) store


# ----------------------------------------------------------------------------
# Pallas wrapper (no grid: single invocation, everything VMEM-resident)
# ----------------------------------------------------------------------------
def make_cnn1d_forward(plan):
    B, k = plan["B"], plan["k"]
    cin0, T = plan["cin0"], plan["T"]
    head = plan["head"]
    c3, l3, out_dim = head["c3"], head["l3"], head["out_dim"]

    kern = partial(_cnn1d_fused_kernel, B=B, k=k,
                   blocks=plan["blocks"], head=head)

    # Advisory cost hint for XLA's scheduler around the tiny custom call.
    flops = 2 * B * (c3 * l3) * out_dim
    for blk in plan["blocks"]:
        W = B * blk["lin"]
        lf = W - k + 1
        flops += 2 * blk["cout"] * blk["cin"] * W                 # 1x1 conv
        flops += 2 * blk["cout"] * (k * blk["cout"]) * lf         # k-tap conv
        flops += 2 * blk["cout"] * lf * (B * blk["lout"])         # column picker

    def forward(x, wbuf):
        bytes_accessed = (x.size + wbuf.size + B * out_dim) * 4
        return pl.pallas_call(
            kern,
            out_shape=jax.ShapeDtypeStruct((B, out_dim), jnp.float32),
            in_specs=[pl.BlockSpec(memory_space=pltpu.MemorySpace.VMEM),
                      pl.BlockSpec(memory_space=pltpu.MemorySpace.VMEM)],
            out_specs=pl.BlockSpec(memory_space=pltpu.MemorySpace.VMEM),
            scratch_shapes=[pltpu.VMEM((cin0, B * T), jnp.float32),
                            pltpu.VMEM((B, c3 * l3), jnp.float32)],
            cost_estimate=pl.CostEstimate(flops=flops, transcendentals=0,
                                          bytes_accessed=bytes_accessed),
        )(x, wbuf)

    return forward


# ----------------------------------------------------------------------------
# Deterministic synthetic parameters (PyTorch layouts)
# ----------------------------------------------------------------------------
def _conv1d_init(kw, kb, cin, cout, k):
    bound = 1.0 / math.sqrt(cin * k)
    w = jax.random.uniform(kw, (cout, cin, k), jnp.float32, -bound, bound)
    b = jax.random.uniform(kb, (cout,), jnp.float32, -bound, bound)
    return w, b


def _block_init(key, cin, cout, k):
    k1, k2, k3, k4 = jax.random.split(key, 4)
    w1, b1 = _conv1d_init(k1, k2, cin, cout, 1)       # Conv1d(cin, cout, 1)
    wk, bk = _conv1d_init(k3, k4, cout, cout, k)      # Conv1d(cout, cout, k, stride)
    return dict(w1=w1, b1=b1, wk=wk, bk=bk,
                gamma=jnp.ones((cout,), jnp.float32),
                beta=jnp.zeros((cout,), jnp.float32),
                rmean=jnp.zeros((cout,), jnp.float32),
                rvar=jnp.ones((cout,), jnp.float32))


def init_torch_params(key, in_dim, hid_dim, out_dim, height, kernel=3, stride=1):
    """Synthetic params in PyTorch layouts (Conv1d: (Cout,Cin,k); Linear: (out,in))."""
    b1_dim = hid_dim // 2
    ks = jax.random.split(key, 4)
    p = {"b1":  _block_init(ks[0], in_dim,  b1_dim,  kernel),
         "bx0": _block_init(ks[1], b1_dim,  hid_dim, kernel),
         "bn":  _block_init(ks[2], hid_dim, out_dim, kernel)}
    # cal_cnn_outlen equivalent: only the k-tap valid convs change the length.
    L = height
    L = (L - kernel) // 1 + 1            # b1     (stride 1)
    L = (L - kernel) // 2 + 1            # bx[0]  (stride 2)
    L = (L - kernel) // stride + 1       # bn     (ctor stride)
    width_len = L
    kw, kb = jax.random.split(ks[3])
    flat = out_dim * width_len
    bound = 1.0 / math.sqrt(flat)
    p["l1_w"] = jax.random.uniform(kw, (out_dim, flat), jnp.float32, -bound, bound)
    p["l1_b"] = jax.random.uniform(kb, (out_dim,), jnp.float32, -bound, bound)
    return p, width_len


# ----------------------------------------------------------------------------
# Pack PyTorch-layout params into ONE buffer + a static plan (runs once)
# ----------------------------------------------------------------------------
def _ceil8(n):
    return ((n + 7) // 8) * 8


def pack_params(tp, *, B, T, kernel=3, strides=(1, 2, 1), eps=1e-5):
    """Returns (wbuf, plan).  wbuf is one contiguous f32 buffer holding every
    weight / bias / folded-BN affine / constant column picker at 8-row-aligned
    static offsets (2 input DMAs total).  plan holds only static Python ints."""
    entries = []

    def add(key, arr):
        entries.append((key, np.asarray(arr, np.float32)))

    blocks = []
    lin = T
    for bi, (bp, s) in enumerate(zip((tp["b1"], tp["bx0"], tp["bn"]), strides)):
        w1 = np.asarray(bp["w1"])                     # (cout, cin, 1)
        wk = np.asarray(bp["wk"])                     # (cout, cout, k)
        cout, cin = w1.shape[0], w1.shape[1]
        lout = (lin - kernel) // s + 1
        lf = B * lin - kernel + 1                     # stride-1 windows, batch folded
        add(f"w1_{bi}", w1[:, :, 0])                                       # (cout, cin)
        add(f"wk_{bi}", np.transpose(wk, (0, 2, 1)).reshape(cout, kernel * cout))
        scale = np.asarray(bp["gamma"]) / np.sqrt(np.asarray(bp["rvar"]) + eps)
        shift = np.asarray(bp["beta"]) - np.asarray(bp["rmean"]) * scale
        add(f"aff_{bi}", np.stack([np.asarray(bp["b1"]), np.asarray(bp["bk"]),
                                   scale, shift], axis=1))                  # (cout, 4)
        # Constant 0/1 column picker: keeps the conv windows that stay inside
        # one batch element and applies the stride (computed at pack time).
        sel = np.zeros((lf, B * lout), np.float32)
        for b in range(B):
            for p in range(lout):
                sel[b * lin + p * s, b * lout + p] = 1.0
        add(f"sel_{bi}", sel)
        blocks.append(dict(cin=cin, cout=cout, lin=lin, lout=lout, stride=s,
                           w1=f"w1_{bi}", wk=f"wk_{bi}", aff=f"aff_{bi}",
                           sel=f"sel_{bi}"))
        lin = lout

    c3, l3 = blocks[-1]["cout"], lin
    out_dim = int(tp["l1_w"].shape[0])
    add("wl", np.asarray(tp["l1_w"]).T)               # (c3*l3, out_dim): flat = c*L + t
    add("bl", np.asarray(tp["l1_b"]).reshape(1, out_dim))

    width = max(a.shape[1] for _, a in entries)
    rows = sum(_ceil8(a.shape[0]) for _, a in entries)
    buf = np.zeros((rows, width), np.float32)
    offs, r = {}, 0
    for key, a in entries:
        buf[r:r + a.shape[0], :a.shape[1]] = a
        offs[key] = (r, a.shape[0], a.shape[1])
        r += _ceil8(a.shape[0])

    for blk in blocks:
        for f in ("w1", "wk", "aff", "sel"):
            blk[f] = offs[blk[f]]
    head = dict(c3=c3, l3=l3, out_dim=out_dim, wl=offs["wl"], bl=offs["bl"])
    plan = dict(B=B, T=T, cin0=blocks[0]["cin"], k=kernel,
                blocks=tuple(blocks), head=head)
    return jnp.asarray(buf), plan


# ----------------------------------------------------------------------------
# Pure-JAX (non-Pallas) eval-mode reference for correctness checking
# ----------------------------------------------------------------------------
def cnn1d_reference(x, tp, kernel=3, eps=1e-5):
    def block(h, p, stride):
        y = jnp.einsum("oc,bcl->bol", p["w1"][:, :, 0], h) + p["b1"][None, :, None]
        y = jnp.maximum(y, 0.0)
        Lo = (y.shape[-1] - kernel) // stride + 1
        acc = jnp.zeros((y.shape[0], p["wk"].shape[0], Lo), jnp.float32)
        for i in range(kernel):
            acc = acc + jnp.einsum("oc,bcl->bol", p["wk"][:, :, i],
                                   y[:, :, i:i + stride * (Lo - 1) + 1:stride])
        acc = jnp.maximum(acc + p["bk"][None, :, None], 0.0)
        scale = p["gamma"] / jnp.sqrt(p["rvar"] + eps)
        shift = p["beta"] - p["rmean"] * scale
        return acc * scale[None, :, None] + shift[None, :, None]

    y = block(x, tp["b1"], 1)
    y = block(y, tp["bx0"], 2)
    y = block(y, tp["bn"], 1)
    flat = y.reshape(y.shape[0], -1)                  # torch.flatten(x, 1)
    return flat @ tp["l1_w"].T + tp["l1_b"][None, :]


# ----------------------------------------------------------------------------
if __name__ == "__main__":
    # Small shapes: batch=2, in_dim=4, hid_dim=16 (b1_dim=8), out_dim=8, T=16.
    B, in_dim, hid_dim, out_dim, T = 2, 4, 16, 8, 16

    key = jax.random.PRNGKey(0)
    kx, kp = jax.random.split(key)
    x = jax.random.normal(kx, (B, in_dim, T), jnp.float32)      # (B, C, T), as PyTorch
    torch_params, width_len = init_torch_params(kp, in_dim, hid_dim, out_dim, T)
    wbuf, plan = pack_params(torch_params, B=B, T=T)
    assert plan["head"]["l3"] == width_len, (plan["head"]["l3"], width_len)

    fwd = jax.jit(make_cnn1d_forward(plan))
    out = jax.block_until_ready(fwd(x, wbuf))

    assert out.shape == (B, out_dim), out.shape
    assert bool(jnp.all(jnp.isfinite(out)))

    # Cross-check against the pure-JAX reference (loose tol: MXU default-precision
    # f32 matmuls differ slightly between the XLA and Mosaic paths).
    ref = cnn1d_reference(x, torch_params)
    err = float(jnp.max(jnp.abs(out - ref)))
    tol = 5e-2 * float(jnp.max(jnp.abs(ref))) + 1e-3
    assert err <= tol, (err, tol)

    print("KERNEL_OK")
</pallas_src>

<mosaic_0001>
module attributes {stable_mosaic.version = 11 : i64} {
  func.func @_cnn1d_fused_kernel(%arg0: memref<2x4x16xf32, #tpu.memory_space<vmem>>, %arg1: memref<216x48xf32, #tpu.memory_space<vmem>>, %arg2: memref<2x8xf32, #tpu.memory_space<vmem>>, %arg3: memref<4x32xf32, #tpu.memory_space<vmem>>, %arg4: memref<2x32xf32, #tpu.memory_space<vmem>>) attributes {dimension_semantics = [], scalar_prefetch = 0 : i64, scratch_operands = 2 : i64, tpu.core_type = #tpu.core_type<tc>} {
    %c0 = arith.constant 0 : index
    %c0_0 = arith.constant 0 : index
    %c0_1 = arith.constant 0 : index
    %0 = vector.load %arg0[%c0, %c0_0, %c0_1] : memref<2x4x16xf32, #tpu.memory_space<vmem>>, vector<1x4x16xf32>
    %1 = vector.shape_cast %0 : vector<1x4x16xf32> to vector<4x16xf32>
    %c0_2 = arith.constant 0 : index
    %c0_3 = arith.constant 0 : index
    %2 = vector.load %arg3[%c0_2, %c0_3] : memref<4x32xf32, #tpu.memory_space<vmem>>, vector<4x16xf32>
    tpu.vector_store %arg3[%c0_2, %c0_3], %1 {strides = array<i32>} : memref<4x32xf32, #tpu.memory_space<vmem>>, vector<4x16xf32>,
    %c1 = arith.constant 1 : index
    %c0_4 = arith.constant 0 : index
    %c0_5 = arith.constant 0 : index
    %3 = vector.load %arg0[%c1, %c0_4, %c0_5] : memref<2x4x16xf32, #tpu.memory_space<vmem>>, vector<1x4x16xf32>
    %4 = vector.shape_cast %3 : vector<1x4x16xf32> to vector<4x16xf32>
    %c0_6 = arith.constant 0 : index
    %c16 = arith.constant 16 : index
    %5 = vector.load %arg3[%c0_6, %c16] : memref<4x32xf32, #tpu.memory_space<vmem>>, vector<4x16xf32>
    tpu.vector_store %arg3[%c0_6, %c16], %4 {strides = array<i32>} : memref<4x32xf32, #tpu.memory_space<vmem>>, vector<4x16xf32>,
    %c0_7 = arith.constant 0 : index
    %c0_8 = arith.constant 0 : index
    %6 = vector.load %arg3[%c0_7, %c0_8] : memref<4x32xf32, #tpu.memory_space<vmem>>, vector<4x32xf32>
    %c0_9 = arith.constant 0 : index
    %c0_10 = arith.constant 0 : index
    %7 = vector.load %arg1[%c0_9, %c0_10] : memref<216x48xf32, #tpu.memory_space<vmem>>, vector<8x4xf32>
    %c8 = arith.constant 8 : index
    %c0_11 = arith.constant 0 : index
    %8 = vector.load %arg1[%c8, %c0_11] : memref<216x48xf32, #tpu.memory_space<vmem>>, vector<8x24xf32>
    %c16_12 = arith.constant 16 : index
    %c0_13 = arith.constant 0 : index
    %9 = vector.load %arg1[%c16_12, %c0_13] : memref<216x48xf32, #tpu.memory_space<vmem>>, vector<8x4xf32>
    %c24 = arith.constant 24 : index
    %c0_14 = arith.constant 0 : index
    %10 = vector.load %arg1[%c24, %c0_14] : memref<216x48xf32, #tpu.memory_space<vmem>>, vector<30x28xf32>
    %cst = arith.constant dense<0.000000e+00> : vector<8x32xf32>
    %11 = tpu.matmul %7, %6, %cst {dimension_numbers = #tpu.dot_dimension_numbers<[1], [0], [0], [1], [0, 0, 1, 1], [], []>} : vector<8x4xf32>, vector<4x32xf32>, vector<8x32xf32> -> vector<8x32xf32>
    %12 = vector.extract_strided_slice %9 {offsets = [0, 0], sizes = [8, 1], strides = [1, 1]} : vector<8x4xf32> to vector<8x1xf32>
    %13 = vector.broadcast %12 : vector<8x1xf32> to vector<8x32xf32>
    %14 = arith.addf %11, %13 : vector<8x32xf32>
    %cst_15 = arith.constant 0.000000e+00 : f32
    %15 = vector.broadcast %cst_15 : f32 to vector<8x32xf32>
    %16 = arith.maximumf %14, %15 : vector<8x32xf32>
    %17 = vector.extract_strided_slice %16 {offsets = [0, 0], sizes = [8, 30], strides = [1, 1]} : vector<8x32xf32> to vector<8x30xf32>
    %18 = vector.extract_strided_slice %16 {offsets = [0, 1], sizes = [8, 30], strides = [1, 1]} : vector<8x32xf32> to vector<8x30xf32>
    %19 = vector.extract_strided_slice %16 {offsets = [0, 2], sizes = [8, 30], strides = [1, 1]} : vector<8x32xf32> to vector<8x30xf32>
    %20 = tpu.concatenate %17, %18, %19 in 0 : vector<8x30xf32>, vector<8x30xf32>, vector<8x30xf32> -> vector<24x30xf32>
    %cst_16 = arith.constant dense<0.000000e+00> : vector<8x30xf32>
    %21 = tpu.matmul %8, %20, %cst_16 {dimension_numbers = #tpu.dot_dimension_numbers<[1], [0], [0], [1], [0, 0, 1, 1], [], []>} : vector<8x24xf32>, vector<24x30xf32>, vector<8x30xf32> -> vector<8x30xf32>
    %cst_17 = arith.constant dense<0.000000e+00> : vector<8x28xf32>
    %22 = tpu.matmul %21, %10, %cst_17 {dimension_numbers = #tpu.dot_dimension_numbers<[1], [0], [0], [1], [0, 0, 1, 1], [], []>} : vector<8x30xf32>, vector<30x28xf32>, vector<8x28xf32> -> vector<8x28xf32>
    %23 = vector.extract_strided_slice %9 {offsets = [0, 1], sizes = [8, 1], strides = [1, 1]} : vector<8x4xf32> to vector<8x1xf32>
    %24 = vector.broadcast %23 : vector<8x1xf32> to vector<8x28xf32>
    %25 = arith.addf %22, %24 : vector<8x28xf32>
    %cst_18 = arith.constant 0.000000e+00 : f32
    %26 = vector.broadcast %cst_18 : f32 to vector<8x28xf32>
    %27 = arith.maximumf %25, %26 : vector<8x28xf32>
    %28 = vector.extract_strided_slice %9 {offsets = [0, 2], sizes = [8, 1], strides = [1, 1]} : vector<8x4xf32> to vector<8x1xf32>
    %29 = vector.broadcast %28 : vector<8x1xf32> to vector<8x28xf32>
    %30 = arith.mulf %27, %29 : vector<8x28xf32>
    %31 = vector.extract_strided_slice %9 {offsets = [0, 3], sizes = [8, 1], strides = [1, 1]} : vector<8x4xf32> to vector<8x1xf32>
    %32 = vector.broadcast %31 : vector<8x1xf32> to vector<8x28xf32>
    %33 = arith.addf %30, %32 : vector<8x28xf32>
    %c56 = arith.constant 56 : index
    %c0_19 = arith.constant 0 : index
    %34 = vector.load %arg1[%c56, %c0_19] : memref<216x48xf32, #tpu.memory_space<vmem>>, vector<16x8xf32>
    %c72 = arith.constant 72 : index
    %c0_20 = arith.constant 0 : index
    %35 = vector.load %arg1[%c72, %c0_20] : memref<216x48xf32, #tpu.memory_space<vmem>>, vector<16x48xf32>
    %c88 = arith.constant 88 : index
    %c0_21 = arith.constant 0 : index
    %36 = vector.load %arg1[%c88, %c0_21] : memref<216x48xf32, #tpu.memory_space<vmem>>, vector<16x4xf32>
    %c104 = arith.constant 104 : index
    %c0_22 = arith.constant 0 : index
    %37 = vector.load %arg1[%c104, %c0_22] : memref<216x48xf32, #tpu.memory_space<vmem>>, vector<26x12xf32>
    %cst_23 = arith.constant dense<0.000000e+00> : vector<16x28xf32>
    %38 = tpu.matmul %34, %33, %cst_23 {dimension_numbers = #tpu.dot_dimension_numbers<[1], [0], [0], [1], [0, 0, 1, 1], [], []>} : vector<16x8xf32>, vector<8x28xf32>, vector<16x28xf32> -> vector<16x28xf32>
    %39 = vector.extract_strided_slice %36 {offsets = [0, 0], sizes = [16, 1], strides = [1, 1]} : vector<16x4xf32> to vector<16x1xf32>
    %40 = vector.broadcast %39 : vector<16x1xf32> to vector<16x28xf32>
    %41 = arith.addf %38, %40 : vector<16x28xf32>
    %cst_24 = arith.constant 0.000000e+00 : f32
    %42 = vector.broadcast %cst_24 : f32 to vector<16x28xf32>
    %43 = arith.maximumf %41, %42 : vector<16x28xf32>
    %44 = vector.extract_strided_slice %43 {offsets = [0, 0], sizes = [16, 26], strides = [1, 1]} : vector<16x28xf32> to vector<16x26xf32>
    %45 = vector.extract_strided_slice %43 {offsets = [0, 1], sizes = [16, 26], strides = [1, 1]} : vector<16x28xf32> to vector<16x26xf32>
    %46 = vector.extract_strided_slice %43 {offsets = [0, 2], sizes = [16, 26], strides = [1, 1]} : vector<16x28xf32> to vector<16x26xf32>
    %47 = tpu.concatenate %44, %45, %46 in 0 : vector<16x26xf32>, vector<16x26xf32>, vector<16x26xf32> -> vector<48x26xf32>
    %cst_25 = arith.constant dense<0.000000e+00> : vector<16x26xf32>
    %48 = tpu.matmul %35, %47, %cst_25 {dimension_numbers = #tpu.dot_dimension_numbers<[1], [0], [0], [1], [0, 0, 1, 1], [], []>} : vector<16x48xf32>, vector<48x26xf32>, vector<16x26xf32> -> vector<16x26xf32>
    %cst_26 = arith.constant dense<0.000000e+00> : vector<16x12xf32>
    %49 = tpu.matmul %48, %37, %cst_26 {dimension_numbers = #tpu.dot_dimension_numbers<[1], [0], [0], [1], [0, 0, 1, 1], [], []>} : vector<16x26xf32>, vector<26x12xf32>, vector<16x12xf32> -> vector<16x12xf32>
    %50 = vector.extract_strided_slice %36 {offsets = [0, 1], sizes = [16, 1], strides = [1, 1]} : vector<16x4xf32> to vector<16x1xf32>
    %51 = vector.broadcast %50 : vector<16x1xf32> to vector<16x12xf32>
    %52 = arith.addf %49, %51 : vector<16x12xf32>
    %cst_27 = arith.constant 0.000000e+00 : f32
    %53 = vector.broadcast %cst_27 : f32 to vector<16x12xf32>
    %54 = arith.maximumf %52, %53 : vector<16x12xf32>
    %55 = vector.extract_strided_slice %36 {offsets = [0, 2], sizes = [16, 1], strides = [1, 1]} : vector<16x4xf32> to vector<16x1xf32>
    %56 = vector.broadcast %55 : vector<16x1xf32> to vector<16x12xf32>
    %57 = arith.mulf %54, %56 : vector<16x12xf32>
    %58 = vector.extract_strided_slice %36 {offsets = [0, 3], sizes = [16, 1], strides = [1, 1]} : vector<16x4xf32> to vector<16x1xf32>
    %59 = vector.broadcast %58 : vector<16x1xf32> to vector<16x12xf32>
    %60 = arith.addf %57, %59 : vector<16x12xf32>
    %c136 = arith.constant 136 : index
    %c0_28 = arith.constant 0 : index
    %61 = vector.load %arg1[%c136, %c0_28] : memref<216x48xf32, #tpu.memory_space<vmem>>, vector<8x16xf32>
    %c144 = arith.constant 144 : index
    %c0_29 = arith.constant 0 : index
    %62 = vector.load %arg1[%c144, %c0_29] : memref<216x48xf32, #tpu.memory_space<vmem>>, vector<8x24xf32>
    %c152 = arith.constant 152 : index
    %c0_30 = arith.constant 0 : index
    %63 = vector.load %arg1[%c152, %c0_30] : memref<216x48xf32, #tpu.memory_space<vmem>>, vector<8x4xf32>
    %c160 = arith.constant 160 : index
    %c0_31 = arith.constant 0 : index
    %64 = vector.load %arg1[%c160, %c0_31] : memref<216x48xf32, #tpu.memory_space<vmem>>, vector<10x8xf32>
    %cst_32 = arith.constant dense<0.000000e+00> : vector<8x12xf32>
    %65 = tpu.matmul %61, %60, %cst_32 {dimension_numbers = #tpu.dot_dimension_numbers<[1], [0], [0], [1], [0, 0, 1, 1], [], []>} : vector<8x16xf32>, vector<16x12xf32>, vector<8x12xf32> -> vector<8x12xf32>
    %66 = vector.extract_strided_slice %63 {offsets = [0, 0], sizes = [8, 1], strides = [1, 1]} : vector<8x4xf32> to vector<8x1xf32>
    %67 = vector.broadcast %66 : vector<8x1xf32> to vector<8x12xf32>
    %68 = arith.addf %65, %67 : vector<8x12xf32>
    %cst_33 = arith.constant 0.000000e+00 : f32
    %69 = vector.broadcast %cst_33 : f32 to vector<8x12xf32>
    %70 = arith.maximumf %68, %69 : vector<8x12xf32>
    %71 = vector.extract_strided_slice %70 {offsets = [0, 0], sizes = [8, 10], strides = [1, 1]} : vector<8x12xf32> to vector<8x10xf32>
    %72 = vector.extract_strided_slice %70 {offsets = [0, 1], sizes = [8, 10], strides = [1, 1]} : vector<8x12xf32> to vector<8x10xf32>
    %73 = vector.extract_strided_slice %70 {offsets = [0, 2], sizes = [8, 10], strides = [1, 1]} : vector<8x12xf32> to vector<8x10xf32>
    %74 = tpu.concatenate %71, %72, %73 in 0 : vector<8x10xf32>, vector<8x10xf32>, vector<8x10xf32> -> vector<24x10xf32>
    %cst_34 = arith.constant dense<0.000000e+00> : vector<8x10xf32>
    %75 = tpu.matmul %62, %74, %cst_34 {dimension_numbers = #tpu.dot_dimension_numbers<[1], [0], [0], [1], [0, 0, 1, 1], [], []>} : vector<8x24xf32>, vector<24x10xf32>, vector<8x10xf32> -> vector<8x10xf32>
    %cst_35 = arith.constant dense<0.000000e+00> : vector<8x8xf32>
    %76 = tpu.matmul %75, %64, %cst_35 {dimension_numbers = #tpu.dot_dimension_numbers<[1], [0], [0], [1], [0, 0, 1, 1], [], []>} : vector<8x10xf32>, vector<10x8xf32>, vector<8x8xf32> -> vector<8x8xf32>
    %77 = vector.extract_strided_slice %63 {offsets = [0, 1], sizes = [8, 1], strides = [1, 1]} : vector<8x4xf32> to vector<8x1xf32>
    %78 = vector.broadcast %77 : vector<8x1xf32> to vector<8x8xf32>
    %79 = arith.addf %76, %78 : vector<8x8xf32>
    %cst_36 = arith.constant 0.000000e+00 : f32
    %80 = vector.broadcast %cst_36 : f32 to vector<8x8xf32>
    %81 = arith.maximumf %79, %80 : vector<8x8xf32>
    %82 = vector.extract_strided_slice %63 {offsets = [0, 2], sizes = [8, 1], strides = [1, 1]} : vector<8x4xf32> to vector<8x1xf32>
    %83 = vector.broadcast %82 : vector<8x1xf32> to vector<8x8xf32>
    %84 = arith.mulf %81, %83 : vector<8x8xf32>
    %85 = vector.extract_strided_slice %63 {offsets = [0, 3], sizes = [8, 1], strides = [1, 1]} : vector<8x4xf32> to vector<8x1xf32>
    %86 = vector.broadcast %85 : vector<8x1xf32> to vector<8x8xf32>
    %87 = arith.addf %84, %86 : vector<8x8xf32>
    %88 = vector.extract_strided_slice %87 {offsets = [0, 0], sizes = [1, 4], strides = [1, 1]} : vector<8x8xf32> to vector<1x4xf32>
    %c0_37 = arith.constant 0 : index
    %c0_38 = arith.constant 0 : index
    %89 = vector.load %arg4[%c0_37, %c0_38] : memref<2x32xf32, #tpu.memory_space<vmem>>, vector<1x4xf32>
    tpu.vector_store %arg4[%c0_37, %c0_38], %88 {strides = array<i32>} : memref<2x32xf32, #tpu.memory_space<vmem>>, vector<1x4xf32>,
    %90 = vector.extract_strided_slice %87 {offsets = [1, 0], sizes = [1, 4], strides = [1, 1]} : vector<8x8xf32> to vector<1x4xf32>
    %c0_39 = arith.constant 0 : index
    %c4 = arith.constant 4 : index
    %91 = vector.load %arg4[%c0_39, %c4] : memref<2x32xf32, #tpu.memory_space<vmem>>, vector<1x4xf32>
    tpu.vector_store %arg4[%c0_39, %c4], %90 {strides = array<i32>} : memref<2x32xf32, #tpu.memory_space<vmem>>, vector<1x4xf32>,
    %92 = vector.extract_strided_slice %87 {offsets = [2, 0], sizes = [1, 4], strides = [1, 1]} : vector<8x8xf32> to vector<1x4xf32>
    %c0_40 = arith.constant 0 : index
    %c8_41 = arith.constant 8 : index
    %93 = vector.load %arg4[%c0_40, %c8_41] : memref<2x32xf32, #tpu.memory_space<vmem>>, vector<1x4xf32>
    tpu.vector_store %arg4[%c0_40, %c8_41], %92 {strides = array<i32>} : memref<2x32xf32, #tpu.memory_space<vmem>>, vector<1x4xf32>,
    %94 = vector.extract_strided_slice %87 {offsets = [3, 0], sizes = [1, 4], strides = [1, 1]} : vector<8x8xf32> to vector<1x4xf32>
    %c0_42 = arith.constant 0 : index
    %c12 = arith.constant 12 : index
    %95 = vector.load %arg4[%c0_42, %c12] : memref<2x32xf32, #tpu.memory_space<vmem>>, vector<1x4xf32>
    tpu.vector_store %arg4[%c0_42, %c12], %94 {strides = array<i32>} : memref<2x32xf32, #tpu.memory_space<vmem>>, vector<1x4xf32>,
    %96 = vector.extract_strided_slice %87 {offsets = [4, 0], sizes = [1, 4], strides = [1, 1]} : vector<8x8xf32> to vector<1x4xf32>
    %c0_43 = arith.constant 0 : index
    %c16_44 = arith.constant 16 : index
    %97 = vector.load %arg4[%c0_43, %c16_44] : memref<2x32xf32, #tpu.memory_space<vmem>>, vector<1x4xf32>
    tpu.vector_store %arg4[%c0_43, %c16_44], %96 {strides = array<i32>} : memref<2x32xf32, #tpu.memory_space<vmem>>, vector<1x4xf32>,
    %98 = vector.extract_strided_slice %87 {offsets = [5, 0], sizes = [1, 4], strides = [1, 1]} : vector<8x8xf32> to vector<1x4xf32>
    %c0_45 = arith.constant 0 : index
    %c20 = arith.constant 20 : index
    %99 = vector.load %arg4[%c0_45, %c20] : memref<2x32xf32, #tpu.memory_space<vmem>>, vector<1x4xf32>
    tpu.vector_store %arg4[%c0_45, %c20], %98 {strides = array<i32>} : memref<2x32xf32, #tpu.memory_space<vmem>>, vector<1x4xf32>,
    %100 = vector.extract_strided_slice %87 {offsets = [6, 0], sizes = [1, 4], strides = [1, 1]} : vector<8x8xf32> to vector<1x4xf32>
    %c0_46 = arith.constant 0 : index
    %c24_47 = arith.constant 24 : index
    %101 = vector.load %arg4[%c0_46, %c24_47] : memref<2x32xf32, #tpu.memory_space<vmem>>, vector<1x4xf32>
    tpu.vector_store %arg4[%c0_46, %c24_47], %100 {strides = array<i32>} : memref<2x32xf32, #tpu.memory_space<vmem>>, vector<1x4xf32>,
    %102 = vector.extract_strided_slice %87 {offsets = [7, 0], sizes = [1, 4], strides = [1, 1]} : vector<8x8xf32> to vector<1x4xf32>
    %c0_48 = arith.constant 0 : index
    %c28 = arith.constant 28 : index
    %103 = vector.load %arg4[%c0_48, %c28] : memref<2x32xf32, #tpu.memory_space<vmem>>, vector<1x4xf32>
    tpu.vector_store %arg4[%c0_48, %c28], %102 {strides = array<i32>} : memref<2x32xf32, #tpu.memory_space<vmem>>, vector<1x4xf32>,
    %104 = vector.extract_strided_slice %87 {offsets = [0, 4], sizes = [1, 4], strides = [1, 1]} : vector<8x8xf32> to vector<1x4xf32>
    %c1_49 = arith.constant 1 : index
    %c0_50 = arith.constant 0 : index
    %105 = vector.load %arg4[%c1_49, %c0_50] : memref<2x32xf32, #tpu.memory_space<vmem>>, vector<1x4xf32>
    tpu.vector_store %arg4[%c1_49, %c0_50], %104 {strides = array<i32>} : memref<2x32xf32, #tpu.memory_space<vmem>>, vector<1x4xf32>,
    %106 = vector.extract_strided_slice %87 {offsets = [1, 4], sizes = [1, 4], strides = [1, 1]} : vector<8x8xf32> to vector<1x4xf32>
    %c1_51 = arith.constant 1 : index
    %c4_52 = arith.constant 4 : index
    %107 = vector.load %arg4[%c1_51, %c4_52] : memref<2x32xf32, #tpu.memory_space<vmem>>, vector<1x4xf32>
    tpu.vector_store %arg4[%c1_51, %c4_52], %106 {strides = array<i32>} : memref<2x32xf32, #tpu.memory_space<vmem>>, vector<1x4xf32>,
    %108 = vector.extract_strided_slice %87 {offsets = [2, 4], sizes = [1, 4], strides = [1, 1]} : vector<8x8xf32> to vector<1x4xf32>
    %c1_53 = arith.constant 1 : index
    %c8_54 = arith.constant 8 : index
    %109 = vector.load %arg4[%c1_53, %c8_54] : memref<2x32xf32, #tpu.memory_space<vmem>>, vector<1x4xf32>
    tpu.vector_store %arg4[%c1_53, %c8_54], %108 {strides = array<i32>} : memref<2x32xf32, #tpu.memory_space<vmem>>, vector<1x4xf32>,
    %110 = vector.extract_strided_slice %87 {offsets = [3, 4], sizes = [1, 4], strides = [1, 1]} : vector<8x8xf32> to vector<1x4xf32>
    %c1_55 = arith.constant 1 : index
    %c12_56 = arith.constant 12 : index
    %111 = vector.load %arg4[%c1_55, %c12_56] : memref<2x32xf32, #tpu.memory_space<vmem>>, vector<1x4xf32>
    tpu.vector_store %arg4[%c1_55, %c12_56], %110 {strides = array<i32>} : memref<2x32xf32, #tpu.memory_space<vmem>>, vector<1x4xf32>,
    %112 = vector.extract_strided_slice %87 {offsets = [4, 4], sizes = [1, 4], strides = [1, 1]} : vector<8x8xf32> to vector<1x4xf32>
    %c1_57 = arith.constant 1 : index
    %c16_58 = arith.constant 16 : index
    %113 = vector.load %arg4[%c1_57, %c16_58] : memref<2x32xf32, #tpu.memory_space<vmem>>, vector<1x4xf32>
    tpu.vector_store %arg4[%c1_57, %c16_58], %112 {strides = array<i32>} : memref<2x32xf32, #tpu.memory_space<vmem>>, vector<1x4xf32>,
    %114 = vector.extract_strided_slice %87 {offsets = [5, 4], sizes = [1, 4], strides = [1, 1]} : vector<8x8xf32> to vector<1x4xf32>
    %c1_59 = arith.constant 1 : index
    %c20_60 = arith.constant 20 : index
    %115 = vector.load %arg4[%c1_59, %c20_60] : memref<2x32xf32, #tpu.memory_space<vmem>>, vector<1x4xf32>
    tpu.vector_store %arg4[%c1_59, %c20_60], %114 {strides = array<i32>} : memref<2x32xf32, #tpu.memory_space<vmem>>, vector<1x4xf32>,
    %116 = vector.extract_strided_slice %87 {offsets = [6, 4], sizes = [1, 4], strides = [1, 1]} : vector<8x8xf32> to vector<1x4xf32>
    %c1_61 = arith.constant 1 : index
    %c24_62 = arith.constant 24 : index
    %117 = vector.load %arg4[%c1_61, %c24_62] : memref<2x32xf32, #tpu.memory_space<vmem>>, vector<1x4xf32>
    tpu.vector_store %arg4[%c1_61, %c24_62], %116 {strides = array<i32>} : memref<2x32xf32, #tpu.memory_space<vmem>>, vector<1x4xf32>,
    %118 = vector.extract_strided_slice %87 {offsets = [7, 4], sizes = [1, 4], strides = [1, 1]} : vector<8x8xf32> to vector<1x4xf32>
    %c1_63 = arith.constant 1 : index
    %c28_64 = arith.constant 28 : index
    %119 = vector.load %arg4[%c1_63, %c28_64] : memref<2x32xf32, #tpu.memory_space<vmem>>, vector<1x4xf32>
    tpu.vector_store %arg4[%c1_63, %c28_64], %118 {strides = array<i32>} : memref<2x32xf32, #tpu.memory_space<vmem>>, vector<1x4xf32>,
    %c176 = arith.constant 176 : index
    %c0_65 = arith.constant 0 : index
    %120 = vector.load %arg1[%c176, %c0_65] : memref<216x48xf32, #tpu.memory_space<vmem>>, vector<32x8xf32>
    %c208 = arith.constant 208 : index
    %c0_66 = arith.constant 0 : index
    %121 = vector.load %arg1[%c208, %c0_66] : memref<216x48xf32, #tpu.memory_space<vmem>>, vector<1x8xf32>
    %c0_67 = arith.constant 0 : index
    %c0_68 = arith.constant 0 : index
    %122 = vector.load %arg4[%c0_67, %c0_68] : memref<2x32xf32, #tpu.memory_space<vmem>>, vector<2x32xf32>
    %cst_69 = arith.constant dense<0.000000e+00> : vector<2x8xf32>
    %123 = tpu.matmul %122, %120, %cst_69 {dimension_numbers = #tpu.dot_dimension_numbers<[1], [0], [0], [1], [0, 0, 1, 1], [], []>} : vector<2x32xf32>, vector<32x8xf32>, vector<2x8xf32> -> vector<2x8xf32>
    %124 = vector.broadcast %121 : vector<1x8xf32> to vector<2x8xf32>
    %125 = arith.addf %123, %124 : vector<2x8xf32>
    %c0_70 = arith.constant 0 : index
    %c0_71 = arith.constant 0 : index
    %126 = vector.load %arg2[%c0_70, %c0_71] : memref<2x8xf32, #tpu.memory_space<vmem>>, vector<2x8xf32>
    tpu.vector_store %arg2[%c0_70, %c0_71], %125 {strides = array<i32>} : memref<2x8xf32, #tpu.memory_space<vmem>>, vector<2x8xf32>,
    return
  }
}

</mosaic_0001>

<llo_original>
// kernel: forward.1
$region0: #{forward.1}
  #allocation0 [shape = 'u32[]', space=smem, size = 0x4, offset = 0x4, fixed_abs, tag = 'smem constant byte address 0x4 - core index']
  #allocation1 [shape = 'u32[144,128]{1,0:T(1,128)}', space=vmem, size = 0x12000, scoped, tag = 'internal scratch']
  #allocation2 [shape = 'f32[4,32]{1,0:T(4,128)}', space=vmem, size = 0x800, scoped, tag = 'scratch operand']
  #allocation3 [shape = 'f32[2,32]{1,0:T(2,128)}', space=vmem, size = 0x400, scoped, tag = 'scratch operand']
  %s0 = inlined_call_operand.vmem [shape: f32[2,4,16], index: 0, kind: input, shape index: {}]
  %s1 = inlined_call_operand.vmem [shape: f32[216,48], index: 1, kind: input, shape index: {}]
  %s2 = inlined_call_operand.hbm [shape: f32[2,8], index: 2, kind: output, shape index: {}]
  %s3 = sld [smem:[#allocation0]]
  $region18: #{forward.1} parent=0
    _
  %s5 = ssub.s32 1, %s3
  %s6 = scalar_select 0, %s5, %s3
  $region1: #{forward.1} parent=0
    #allocation4 [shape = 'u8[1024]{0}', space=vmem, size = 0x400, scoped, tag = 'output window, operand 0, single buffered']
    #allocation5 [shape = 's32[1]{0}', space=sflag, size = 0x4, scoped, tag = 'scoped memory for forward.1']
    %7 = vsyncpa [#allocation5], 0
    // Predicated region
    $region2: #{forward.1} parent=1 // pred_check
      _
    $region3: #{forward.1} parent=1 // pred_check_branch
      %9 = sbr.rel (0) target = $region5
    $region4: #{forward.1} parent=1 // pred_region
      _
    $region5: #{forward.1} parent=1 // pred_fallthru
      _
    // Predicated region
    $region6: #{forward.1} parent=1 // pred_check
      _
    $region7: #{forward.1} parent=1 // pred_check_branch
      %11 = sbr.rel (0) target = $region9
    $region8: #{forward.1} parent=1 // pred_region
      _
    $region9: #{forward.1} parent=1 // pred_fallthru
      _
    %v12 = vld [vmem:[%s0] sm:$0xf]
    %vm13 = vcmask 125952
    %14 = vst.msk [vmem:[#allocation2] sm:$0xf] %vm13, %v12
    %s15 = scalar_lea.vmem %s0, 4
    %v16 = vld [vmem:[%s15] sm:$0xf]
    %18 = vrot.lane.b32.xlu0 %v16, 16
    %v19 = vpop.permute.xlu0 %18
    %vm21 = vcmask 257152
    %22 = vst.msk [vmem:[#allocation2] sm:$0xf] %vm21, %v19
    %v23 = vld [vmem:[#allocation2] sm:$0xf]
    %v24 = vld [vmem:[%s1] sm:$0xff]
    %v25 = vld [vmem:[%s1 + $0x8] sm:$0xff]
    %v26 = vld [vmem:[%s1 + $0x10] sm:$0xff]
    %v27 = vld [vmem:[%s1 + $0x18] sm:$0xff]
    %v28 = vld [vmem:[%s1 + $0x20] sm:$0xff]
    %v29 = vld [vmem:[%s1 + $0x28] sm:$0xff]
    %v30 = vld [vmem:[%s1 + $0x30] sm:$0x3f]
    %32 = vset.pattern.permute.xlu0 0
    %33 = vperm.xlu0 %32, %v26
    %v34 = vpop.permute.xlu0 %33
    %vm36 = vcmask 31744
    %v38 = vsel %vm36, %v24, 0
    %vm40 = vcmask 1043456
    %v42 = vsel %vm40, %v23, 0
    %44 = vmatprep.subr.mxu0 0.0
    %45 = vmatpush1.msra.mxu0 %v42
    %46 = vmatprep.subr.mxu0 0.0
    %47 = vmatpush1.msra.mxu0 0.0
    %48 = vmatprep.subr.mxu0 0.0
    %49 = vmatpush1.msra.mxu0 0.0
    %50 = vmatprep.subr.mxu0 0.0
    %51 = vmatpush1.msra.mxu0 0.0
    %52 = vmatprep.subr.mxu0 0.0
    %53 = vmatpush1.msra.mxu0 0.0
    %54 = vmatprep.subr.mxu0 0.0
    %55 = vmatpush1.msra.mxu0 0.0
    %56 = vmatprep.subr.mxu0 0.0
    %57 = vmatpush1.msra.mxu0 0.0
    %58 = vmatprep.subr.mxu0 0.0
    %59 = vmatpush1.msra.mxu0 0.0
    %60 = vmatprep.subr.mxu0 0.0
    %61 = vmatpush1.msra.mxu0 0.0
    %62 = vmatprep.subr.mxu0 0.0
    %63 = vmatpush1.msra.mxu0 0.0
    %64 = vmatprep.subr.mxu0 0.0
    %65 = vmatpush1.msra.mxu0 0.0
    %66 = vmatprep.subr.mxu0 0.0
    %67 = vmatpush1.msra.mxu0 0.0
    %68 = vmatprep.subr.mxu0 0.0
    %69 = vmatpush1.msra.mxu0 0.0
    %70 = vmatprep.subr.mxu0 0.0
    %71 = vmatpush1.msra.mxu0 0.0
    %72 = vmatprep.subr.mxu0 0.0
    %73 = vmatpush1.msra.mxu0 0.0
    %74 = vmatprep.subr.mxu0 0.0
    %75 = vmatpush1.msra.mxu0 0.0
    %76 = vmatprep.subr.mxu0 0.0
    %77 = vmatpush1.msra.mxu0 0.0
    %78 = vmatprep.subr.mxu0 0.0
    %79 = vmatpush1.msra.mxu0 0.0
    %80 = vmatprep.subr.mxu0 0.0
    %81 = vmatpush1.msra.mxu0 0.0
    %82 = vmatprep.subr.mxu0 0.0
    %83 = vmatpush1.msra.mxu0 0.0
    %84 = vmatprep.subr.mxu0 0.0
    %85 = vmatpush1.msra.mxu0 0.0
    %86 = vmatprep.subr.mxu0 0.0
    %87 = vmatpush1.msra.mxu0 0.0
    %88 = vmatprep.subr.mxu0 0.0
    %89 = vmatpush1.msra.mxu0 0.0
    %90 = vmatprep.subr.mxu0 0.0
    %91 = vmatpush1.msra.mxu0 0.0
    %92 = vmatprep.subr.mxu0 0.0
    %93 = vmatpush1.msra.mxu0 0.0
    %94 = vmatprep.subr.mxu0 0.0
    %95 = vmatpush1.msra.mxu0 0.0
    %96 = vmatprep.subr.mxu0 0.0
    %97 = vmatpush1.msra.mxu0 0.0
    %98 = vmatprep.subr.mxu0 0.0
    %99 = vmatpush1.msra.mxu0 0.0
    %100 = vmatprep.subr.mxu0 0.0
    %101 = vmatpush1.msra.mxu0 0.0
    %102 = vmatprep.subr.mxu0 0.0
    %103 = vmatpush1.msra.mxu0 0.0
    %104 = vmatprep.subr.mxu0 0.0
    %105 = vmatpush1.msra.mxu0 0.0
    %106 = vmatprep.subr.mxu0 0.0
    %107 = vmatpush1.msra.mxu0 0.0
    %108 = vmatprep.mubr.f32.mxu0 0.0
    %109 = vmatmul.mubr.f32.gmra.mrb[0].mxu0 %v38
    %v110 = vpop.f32.mrb[0].mxu0
    %v111 = vadd.f32 %v34, %v110
    %v112 = vpop.f32.mrb[0].mxu0
    %113 = vdwg.mxu0
    %v114 = vmax.f32 %v111, 0.0
    %116 = vrot.lane.b32.xlu0 %v114, 127
    %v117 = vpop.permute.xlu0 %116
    %119 = vrot.lane.b32.xlu0 %v114, 126
    %v120 = vpop.permute.xlu0 %119
    %vm122 = vcmask 195584
    %v124 = vsel %vm122, %v25, 0
    %126 = vmatprep.subr.mxu0 0.0
    %127 = vmatpush1.msra.mxu0 %v114
    %128 = vmatprep.subr.mxu0 0.0
    %129 = vmatpush1.msra.mxu0 %v117
    %130 = vmatprep.subr.mxu0 0.0
    %131 = vmatpush1.msra.mxu0 %v120
    %132 = vmatprep.subr.mxu0 0.0
    %133 = vmatpush1.msra.mxu0 0.0
    %134 = vmatprep.subr.mxu0 0.0
    %135 = vmatpush1.msra.mxu0 0.0
    %136 = vmatprep.subr.mxu0 0.0
    %137 = vmatpush1.msra.mxu0 0.0
    %138 = vmatprep.subr.mxu0 0.0
    %139 = vmatpush1.msra.mxu0 0.0
    %140 = vmatprep.subr.mxu0 0.0
    %141 = vmatpush1.msra.mxu0 0.0
    %142 = vmatprep.subr.mxu0 0.0
    %143 = vmatpush1.msra.mxu0 0.0
    %144 = vmatprep.subr.mxu0 0.0
    %145 = vmatpush1.msra.mxu0 0.0
    %146 = vmatprep.subr.mxu0 0.0
    %147 = vmatpush1.msra.mxu0 0.0
    %148 = vmatprep.subr.mxu0 0.0
    %149 = vmatpush1.msra.mxu0 0.0
    %150 = vmatprep.subr.mxu0 0.0
    %151 = vmatpush1.msra.mxu0 0.0
    %152 = vmatprep.subr.mxu0 0.0
    %153 = vmatpush1.msra.mxu0 0.0
    %154 = vmatprep.subr.mxu0 0.0
    %155 = vmatpush1.msra.mxu0 0.0
    %156 = vmatprep.subr.mxu0 0.0
    %157 = vmatpush1.msra.mxu0 0.0
    %158 = vmatprep.subr.mxu0 0.0
    %159 = vmatpush1.msra.mxu0 0.0
    %160 = vmatprep.subr.mxu0 0.0
    %161 = vmatpush1.msra.mxu0 0.0
    %162 = vmatprep.subr.mxu0 0.0
    %163 = vmatpush1.msra.mxu0 0.0
    %164 = vmatprep.subr.mxu0 0.0
    %165 = vmatpush1.msra.mxu0 0.0
    %166 = vmatprep.subr.mxu0 0.0
    %167 = vmatpush1.msra.mxu0 0.0
    %168 = vmatprep.subr.mxu0 0.0
    %169 = vmatpush1.msra.mxu0 0.0
    %170 = vmatprep.subr.mxu0 0.0
    %171 = vmatpush1.msra.mxu0 0.0
    %172 = vmatprep.subr.mxu0 0.0
    %173 = vmatpush1.msra.mxu0 0.0
    %174 = vmatprep.subr.mxu0 0.0
    %175 = vmatpush1.msra.mxu0 0.0
    %176 = vmatprep.subr.mxu0 0.0
    %177 = vmatpush1.msra.mxu0 0.0
    %178 = vmatprep.subr.mxu0 0.0
    %179 = vmatpush1.msra.mxu0 0.0
    %180 = vmatprep.subr.mxu0 0.0
    %181 = vmatpush1.msra.mxu0 0.0
    %182 = vmatprep.subr.mxu0 0.0
    %183 = vmatpush1.msra.mxu0 0.0
    %184 = vmatprep.subr.mxu0 0.0
    %185 = vmatpush1.msra.mxu0 0.0
    %186 = vmatprep.subr.mxu0 0.0
    %187 = vmatpush1.msra.mxu0 0.0
    %188 = vmatprep.subr.mxu0 0.0
    %189 = vmatpush1.msra.mxu0 0.0
    %190 = vmatprep.mubr.f32.mxu0 0.0
    %191 = vmatmul.mubr.f32.gmra.mrb[0].mxu0 %v124
    %v192 = vpop.f32.mrb[0].mxu0
    %v193 = vadd.f32 0.0, %v192
    %v194 = vpop.f32.mrb[0].mxu0
    %195 = vdwg.mxu0
    %196 = vset.pattern.permute.xlu0 1
    %197 = vperm.xlu0 %196, %v26
    %v198 = vpop.permute.xlu0 %197
    %vm200 = vcmask 244736
    %v202 = vsel %vm200, %v193, 0
    %vm204 = vcmask 1045504
    %v206 = vsel %vm204, %v30, 0
    %208 = vmatprep.subr.mxu0 0.0
    %209 = vmatpush1.msra.mxu0 %v27
    %210 = vmatprep.subr.mxu0 0.0
    %211 = vmatpush1.msra.mxu0 %v28
    %212 = vmatprep.subr.mxu0 0.0
    %213 = vmatpush1.msra.mxu0 %v29
    %214 = vmatprep.subr.mxu0 0.0
    %215 = vmatpush1.msra.mxu0 %v206
    %216 = vmatprep.subr.mxu0 0.0
    %217 = vmatpush1.msra.mxu0 0.0
    %218 = vmatprep.subr.mxu0 0.0
    %219 = vmatpush1.msra.mxu0 0.0
    %220 = vmatprep.subr.mxu0 0.0
    %221 = vmatpush1.msra.mxu0 0.0
    %222 = vmatprep.subr.mxu0 0.0
    %223 = vmatpush1.msra.mxu0 0.0
    %224 = vmatprep.subr.mxu0 0.0
    %225 = vmatpush1.msra.mxu0 0.0
    %226 = vmatprep.subr.mxu0 0.0
    %227 = vmatpush1.msra.mxu0 0.0
    %228 = vmatprep.subr.mxu0 0.0
    %229 = vmatpush1.msra.mxu0 0.0
    %230 = vmatprep.subr.mxu0 0.0
    %231 = vmatpush1.msra.mxu0 0.0
    %232 = vmatprep.subr.mxu0 0.0
    %233 = vmatpush1.msra.mxu0 0.0
    %234 = vmatprep.subr.mxu0 0.0
    %235 = vmatpush1.msra.mxu0 0.0
    %236 = vmatprep.subr.mxu0 0.0
    %237 = vmatpush1.msra.mxu0 0.0
    %238 = vmatprep.subr.mxu0 0.0
    %239 = vmatpush1.msra.mxu0 0.0
    %240 = vmatprep.subr.mxu0 0.0
    %241 = vmatpush1.msra.mxu0 0.0
    %242 = vmatprep.subr.mxu0 0.0
    %243 = vmatpush1.msra.mxu0 0.0
    %244 = vmatprep.subr.mxu0 0.0
    %245 = vmatpush1.msra.mxu0 0.0
    %246 = vmatprep.subr.mxu0 0.0
    %247 = vmatpush1.msra.mxu0 0.0
    %248 = vmatprep.subr.mxu0 0.0
    %249 = vmatpush1.msra.mxu0 0.0
    %250 = vmatprep.subr.mxu0 0.0
    %251 = vmatpush1.msra.mxu0 0.0
    %252 = vmatprep.subr.mxu0 0.0
    %253 = vmatpush1.msra.mxu0 0.0
    %254 = vmatprep.subr.mxu0 0.0
    %255 = vmatpush1.msra.mxu0 0.0
    %256 = vmatprep.subr.mxu0 0.0
    %257 = vmatpush1.msra.mxu0 0.0
    %258 = vmatprep.subr.mxu0 0.0
    %259 = vmatpush1.msra.mxu0 0.0
    %260 = vmatprep.subr.mxu0 0.0
    %261 = vmatpush1.msra.mxu0 0.0
    %262 = vmatprep.subr.mxu0 0.0
    %263 = vmatpush1.msra.mxu0 0.0
    %264 = vmatprep.subr.mxu0 0.0
    %265 = vmatpush1.msra.mxu0 0.0
    %266 = vmatprep.subr.mxu0 0.0
    %267 = vmatpush1.msra.mxu0 0.0
    %268 = vmatprep.subr.mxu0 0.0
    %269 = vmatpush1.msra.mxu0 0.0
    %270 = vmatprep.subr.mxu0 0.0
    %271 = vmatpush1.msra.mxu0 0.0
    %272 = vmatprep.mubr.f32.mxu0 0.0
    %273 = vmatmul.mubr.f32.gmra.mrb[0].mxu0 %v202
    %v274 = vpop.f32.mrb[0].mxu0
    %v275 = vadd.f32 %v198, %v274
    %v276 = vpop.f32.mrb[0].mxu0
    %277 = vdwg.mxu0
    %v278 = vmax.f32 %v275, 0.0
    %279 = vset.pattern.permute.xlu0 2
    %280 = vperm.xlu0 %279, %v26
    %v281 = vpop.permute.xlu0 %280
    %v283 = vmul.f32 %v278, %v281
    %284 = vset.pattern.permute.xlu0 3
    %285 = vperm.xlu0 %284, %v26
    %v286 = vpop.permute.xlu0 %285
    %v288 = vadd.f32 %v283, %v286
    %v289 = vld [vmem:[%s1 + $0x38] sm:$0xff]
    %v290 = vld [vmem:[%s1 + $0x40] sm:$0xff]
    %v291 = vld [vmem:[%s1 + $0x48] sm:$0xff]
    %v292 = vld [vmem:[%s1 + $0x50] sm:$0xff]
    %v293 = vld [vmem:[%s1 + $0x58] sm:$0xff]
    %v294 = vld [vmem:[%s1 + $0x60] sm:$0xff]
    %v295 = vld [vmem:[%s1 + $0x68] sm:$0xff]
    %v296 = vld [vmem:[%s1 + $0x70] sm:$0xff]
    %v297 = vld [vmem:[%s1 + $0x78] sm:$0xff]
    %v298 = vld [vmem:[%s1 + $0x80] sm:$0x3]
    %300 = vset.pattern.permute.xlu0 0
    %301 = vperm.xlu0 %300, %v293
    %v302 = vpop.permute.xlu0 %301
    %305 = vset.pattern.permute.xlu0 0
    %306 = vperm.xlu0 %305, %v294
    %v307 = vpop.permute.xlu0 %306
    %vm309 = vcmask 64512
    %v311 = vsel %vm309, %v289, 0
    %v314 = vsel %vm309, %v290, 0
    %316 = vmatprep.subr.mxu0 0.0
    %317 = vmatpush1.msra.mxu0 %v288
    %318 = vmatprep.subr.mxu0 0.0
    %319 = vmatpush1.msra.mxu0 0.0
    %320 = vmatprep.subr.mxu0 0.0
    %321 = vmatpush1.msra.mxu0 0.0
    %322 = vmatprep.subr.mxu0 0.0
    %323 = vmatpush1.msra.mxu0 0.0
    %324 = vmatprep.subr.mxu0 0.0
    %325 = vmatpush1.msra.mxu0 0.0
    %326 = vmatprep.subr.mxu0 0.0
    %327 = vmatpush1.msra.mxu0 0.0
    %328 = vmatprep.subr.mxu0 0.0
    %329 = vmatpush1.msra.mxu0 0.0
    %330 = vmatprep.subr.mxu0 0.0
    %331 = vmatpush1.msra.mxu0 0.0
    %332 = vmatprep.subr.mxu0 0.0
    %333 = vmatpush1.msra.mxu0 0.0
    %334 = vmatprep.subr.mxu0 0.0
    %335 = vmatpush1.msra.mxu0 0.0
    %336 = vmatprep.subr.mxu0 0.0
    %337 = vmatpush1.msra.mxu0 0.0
    %338 = vmatprep.subr.mxu0 0.0
    %339 = vmatpush1.msra.mxu0 0.0
    %340 = vmatprep.subr.mxu0 0.0
    %341 = vmatpush1.msra.mxu0 0.0
    %342 = vmatprep.subr.mxu0 0.0
    %343 = vmatpush1.msra.mxu0 0.0
    %344 = vmatprep.subr.mxu0 0.0
    %345 = vmatpush1.msra.mxu0 0.0
    %346 = vmatprep.subr.mxu0 0.0
    %347 = vmatpush1.msra.mxu0 0.0
    %348 = vmatprep.subr.mxu0 0.0
    %349 = vmatpush1.msra.mxu0 0.0
    %350 = vmatprep.subr.mxu0 0.0
    %351 = vmatpush1.msra.mxu0 0.0
    %352 = vmatprep.subr.mxu0 0.0
    %353 = vmatpush1.msra.mxu0 0.0
    %354 = vmatprep.subr.mxu0 0.0
    %355 = vmatpush1.msra.mxu0 0.0
    %356 = vmatprep.subr.mxu0 0.0
    %357 = vmatpush1.msra.mxu0 0.0
    %358 = vmatprep.subr.mxu0 0.0
    %359 = vmatpush1.msra.mxu0 0.0
    %360 = vmatprep.subr.mxu0 0.0
    %361 = vmatpush1.msra.mxu0 0.0
    %362 = vmatprep.subr.mxu0 0.0
    %363 = vmatpush1.msra.mxu0 0.0
    %364 = vmatprep.subr.mxu0 0.0
    %365 = vmatpush1.msra.mxu0 0.0
    %366 = vmatprep.subr.mxu0 0.0
    %367 = vmatpush1.msra.mxu0 0.0
    %368 = vmatprep.subr.mxu0 0.0
    %369 = vmatpush1.msra.mxu0 0.0
    %370 = vmatprep.subr.mxu0 0.0
    %371 = vmatpush1.msra.mxu0 0.0
    %372 = vmatprep.subr.mxu0 0.0
    %373 = vmatpush1.msra.mxu0 0.0
    %374 = vmatprep.subr.mxu0 0.0
    %375 = vmatpush1.msra.mxu0 0.0
    %376 = vmatprep.subr.mxu0 0.0
    %377 = vmatpush1.msra.mxu0 0.0
    %378 = vmatprep.subr.mxu0 0.0
    %379 = vmatpush1.msra.mxu0 0.0
    %380 = vmatprep.mubr.f32.mxu0 0.0
    %381 = vmatmul.mubr.f32.gmra.mrb[0].mxu0 %v311
    %v382 = vpop.f32.mrb[0].mxu0
    %v383 = vadd.f32 %v302, %v382
    %v384 = vpop.f32.mrb[0].mxu0
    %385 = vmatprep.mubr.f32.mxu0 0.0
    %386 = vmatmul.mubr.f32.gmra.mrb[0].mxu0 %v314
    %v387 = vpop.f32.mrb[0].mxu0
    %v388 = vadd.f32 %v307, %v387
    %v389 = vpop.f32.mrb[0].mxu0
    %390 = vdwg.mxu0
    %v391 = vmax.f32 %v383, 0.0
    %v392 = vmax.f32 %v388, 0.0
    %395 = vrot.lane.b32.xlu0 %v391, 127
    %v396 = vpop.permute.xlu0 %395
    %397 = vrot.lane.b32.xlu0 %v392, 127
    %v398 = vpop.permute.xlu0 %397
    %401 = vrot.lane.b32.xlu0 %v391, 126
    %v402 = vpop.permute.xlu0 %401
    %403 = vrot.lane.b32.xlu0 %v392, 126
    %v404 = vpop.permute.xlu0 %403
    %vm407 = vcmask 392192
    %v409 = vsel %vm407, %v291, 0
    %v412 = vsel %vm407, %v292, 0
    %414 = vmatprep.subr.mxu0 0.0
    %415 = vmatpush1.msra.mxu0 %v391
    %416 = vmatprep.subr.mxu0 0.0
    %417 = vmatpush1.msra.mxu0 %v392
    %418 = vmatprep.subr.mxu0 0.0
    %419 = vmatpush1.msra.mxu0 %v396
    %420 = vmatprep.subr.mxu0 0.0
    %421 = vmatpush1.msra.mxu0 %v398
    %422 = vmatprep.subr.mxu0 0.0
    %423 = vmatpush1.msra.mxu0 %v402
    %424 = vmatprep.subr.mxu0 0.0
    %425 = vmatpush1.msra.mxu0 %v404
    %426 = vmatprep.subr.mxu0 0.0
    %427 = vmatpush1.msra.mxu0 0.0
    %428 = vmatprep.subr.mxu0 0.0
    %429 = vmatpush1.msra.mxu0 0.0
    %430 = vmatprep.subr.mxu0 0.0
    %431 = vmatpush1.msra.mxu0 0.0
    %432 = vmatprep.subr.mxu0 0.0
    %433 = vmatpush1.msra.mxu0 0.0
    %434 = vmatprep.subr.mxu0 0.0
    %435 = vmatpush1.msra.mxu0 0.0
    %436 = vmatprep.subr.mxu0 0.0
    %437 = vmatpush1.msra.mxu0 0.0
    %438 = vmatprep.subr.mxu0 0.0
    %439 = vmatpush1.msra.mxu0 0.0
    %440 = vmatprep.subr.mxu0 0.0
    %441 = vmatpush1.msra.mxu0 0.0
    %442 = vmatprep.subr.mxu0 0.0
    %443 = vmatpush1.msra.mxu0 0.0
    %444 = vmatprep.subr.mxu0 0.0
    %445 = vmatpush1.msra.mxu0 0.0
    %446 = vmatprep.subr.mxu0 0.0
    %447 = vmatpush1.msra.mxu0 0.0
    %448 = vmatprep.subr.mxu0 0.0
    %449 = vmatpush1.msra.mxu0 0.0
    %450 = vmatprep.subr.mxu0 0.0
    %451 = vmatpush1.msra.mxu0 0.0
    %452 = vmatprep.subr.mxu0 0.0
    %453 = vmatpush1.msra.mxu0 0.0
    %454 = vmatprep.subr.mxu0 0.0
    %455 = vmatpush1.msra.mxu0 0.0
    %456 = vmatprep.subr.mxu0 0.0
    %457 = vmatpush1.msra.mxu0 0.0
    %458 = vmatprep.subr.mxu0 0.0
    %459 = vmatpush1.msra.mxu0 0.0
    %460 = vmatprep.subr.mxu0 0.0
    %461 = vmatpush1.msra.mxu0 0.0
    %462 = vmatprep.subr.mxu0 0.0
    %463 = vmatpush1.msra.mxu0 0.0
    %464 = vmatprep.subr.mxu0 0.0
    %465 = vmatpush1.msra.mxu0 0.0
    %466 = vmatprep.subr.mxu0 0.0
    %467 = vmatpush1.msra.mxu0 0.0
    %468 = vmatprep.subr.mxu0 0.0
    %469 = vmatpush1.msra.mxu0 0.0
    %470 = vmatprep.subr.mxu0 0.0
    %471 = vmatpush1.msra.mxu0 0.0
    %472 = vmatprep.subr.mxu0 0.0
    %473 = vmatpush1.msra.mxu0 0.0
    %474 = vmatprep.subr.mxu0 0.0
    %475 = vmatpush1.msra.mxu0 0.0
    %476 = vmatprep.subr.mxu0 0.0
    %477 = vmatpush1.msra.mxu0 0.0
    %478 = vmatprep.mubr.f32.mxu0 0.0
    %479 = vmatmul.mubr.f32.gmra.mrb[0].mxu0 %v409
    %v480 = vpop.f32.mrb[0].mxu0
    %v481 = vadd.f32 0.0, %v480
    %v482 = vpop.f32.mrb[0].mxu0
    %483 = vmatprep.mubr.f32.mxu0 0.0
    %484 = vmatmul.mubr.f32.gmra.mrb[0].mxu0 %v412
    %v485 = vpop.f32.mrb[0].mxu0
    %v486 = vadd.f32 0.0, %v485
    %v487 = vpop.f32.mrb[0].mxu0
    %488 = vdwg.mxu0
    %489 = vset.pattern.permute.xlu0 1
    %490 = vperm.xlu0 %489, %v293
    %v491 = vpop.permute.xlu0 %490
    %493 = vset.pattern.permute.xlu0 1
    %494 = vperm.xlu0 %493, %v294
    %v495 = vpop.permute.xlu0 %494
    %vm497 = vcmask 211968
    %v499 = vsel %vm497, %v481, 0
    %v502 = vsel %vm497, %v486, 0
    %vm504 = vcmask 1041408
    %v506 = vsel %vm504, %v298, 0
    %508 = vmatprep.subr.mxu0 0.0
    %509 = vmatpush1.msra.mxu0 %v295
    %510 = vmatprep.subr.mxu0 0.0
    %511 = vmatpush1.msra.mxu0 %v296
    %512 = vmatprep.subr.mxu0 0.0
    %513 = vmatpush1.msra.mxu0 %v297
    %514 = vmatprep.subr.mxu0 0.0
    %515 = vmatpush1.msra.mxu0 %v506
    %516 = vmatprep.subr.mxu0 0.0
    %517 = vmatpush1.msra.mxu0 0.0
    %518 = vmatprep.subr.mxu0 0.0
    %519 = vmatpush1.msra.mxu0 0.0
    %520 = vmatprep.subr.mxu0 0.0
    %521 = vmatpush1.msra.mxu0 0.0
    %522 = vmatprep.subr.mxu0 0.0
    %523 = vmatpush1.msra.mxu0 0.0
    %524 = vmatprep.subr.mxu0 0.0
    %525 = vmatpush1.msra.mxu0 0.0
    %526 = vmatprep.subr.mxu0 0.0
    %527 = vmatpush1.msra.mxu0 0.0
    %528 = vmatprep.subr.mxu0 0.0
    %529 = vmatpush1.msra.mxu0 0.0
    %530 = vmatprep.subr.mxu0 0.0
    %531 = vmatpush1.msra.mxu0 0.0
    %532 = vmatprep.subr.mxu0 0.0
    %533 = vmatpush1.msra.mxu0 0.0
    %534 = vmatprep.subr.mxu0 0.0
    %535 = vmatpush1.msra.mxu0 0.0
    %536 = vmatprep.subr.mxu0 0.0
    %537 = vmatpush1.msra.mxu0 0.0
    %538 = vmatprep.subr.mxu0 0.0
    %539 = vmatpush1.msra.mxu0 0.0
    %540 = vmatprep.subr.mxu0 0.0
    %541 = vmatpush1.msra.mxu0 0.0
    %542 = vmatprep.subr.mxu0 0.0
    %543 = vmatpush1.msra.mxu0 0.0
    %544 = vmatprep.subr.mxu0 0.0
    %545 = vmatpush1.msra.mxu0 0.0
    %546 = vmatprep.subr.mxu0 0.0
    %547 = vmatpush1.msra.mxu0 0.0
    %548 = vmatprep.subr.mxu0 0.0
    %549 = vmatpush1.msra.mxu0 0.0
    %550 = vmatprep.subr.mxu0 0.0
    %551 = vmatpush1.msra.mxu0 0.0
    %552 = vmatprep.subr.mxu0 0.0
    %553 = vmatpush1.msra.mxu0 0.0
    %554 = vmatprep.subr.mxu0 0.0
    %555 = vmatpush1.msra.mxu0 0.0
    %556 = vmatprep.subr.mxu0 0.0
    %557 = vmatpush1.msra.mxu0 0.0
    %558 = vmatprep.subr.mxu0 0.0
    %559 = vmatpush1.msra.mxu0 0.0
    %560 = vmatprep.subr.mxu0 0.0
    %561 = vmatpush1.msra.mxu0 0.0
    %562 = vmatprep.subr.mxu0 0.0
    %563 = vmatpush1.msra.mxu0 0.0
    %564 = vmatprep.subr.mxu0 0.0
    %565 = vmatpush1.msra.mxu0 0.0
    %566 = vmatprep.subr.mxu0 0.0
    %567 = vmatpush1.msra.mxu0 0.0
    %568 = vmatprep.subr.mxu0 0.0
    %569 = vmatpush1.msra.mxu0 0.0
    %570 = vmatprep.subr.mxu0 0.0
    %571 = vmatpush1.msra.mxu0 0.0
    %572 = vmatprep.mubr.f32.mxu0 0.0
    %573 = vmatmul.mubr.f32.gmra.mrb[0].mxu0 %v499
    %v574 = vpop.f32.mrb[0].mxu0
    %v575 = vadd.f32 %v491, %v574
    %v576 = vpop.f32.mrb[0].mxu0
    %577 = vmatprep.mubr.f32.mxu0 0.0
    %578 = vmatmul.mubr.f32.gmra.mrb[0].mxu0 %v502
    %v579 = vpop.f32.mrb[0].mxu0
    %v580 = vadd.f32 %v495, %v579
    %v581 = vpop.f32.mrb[0].mxu0
    %582 = vdwg.mxu0
    %v583 = vmax.f32 %v575, 0.0
    %v584 = vmax.f32 %v580, 0.0
    %585 = vset.pattern.permute.xlu0 2
    %586 = vperm.xlu0 %585, %v293
    %v587 = vpop.permute.xlu0 %586
    %589 = vset.pattern.permute.xlu0 2
    %590 = vperm.xlu0 %589, %v294
    %v591 = vpop.permute.xlu0 %590
    %v593 = vmul.f32 %v583, %v587
    %v594 = vmul.f32 %v584, %v591
    %595 = vset.pattern.permute.xlu0 3
    %596 = vperm.xlu0 %595, %v293
    %v597 = vpop.permute.xlu0 %596
    %599 = vset.pattern.permute.xlu0 3
    %600 = vperm.xlu0 %599, %v294
    %v601 = vpop.permute.xlu0 %600
    %v603 = vadd.f32 %v593, %v597
    %v604 = vadd.f32 %v594, %v601
    %v605 = vld [vmem:[%s1 + $0x88] sm:$0xff]
    %v606 = vld [vmem:[%s1 + $0x90] sm:$0xff]
    %v607 = vld [vmem:[%s1 + $0x98] sm:$0xff]
    %v608 = vld [vmem:[%s1 + $0xa0] sm:$0xff]
    %v609 = vld [vmem:[%s1 + $0xa8] sm:$0x3]
    %611 = vset.pattern.permute.xlu0 0
    %612 = vperm.xlu0 %611, %v607
    %v613 = vpop.permute.xlu0 %612
    %vm615 = vcmask 130048
    %v617 = vsel %vm615, %v605, 0
    %619 = vmatprep.subr.mxu0 0.0
    %620 = vmatpush1.msra.mxu0 %v603
    %621 = vmatprep.subr.mxu0 0.0
    %622 = vmatpush1.msra.mxu0 %v604
    %623 = vmatprep.subr.mxu0 0.0
    %624 = vmatpush1.msra.mxu0 0.0
    %625 = vmatprep.subr.mxu0 0.0
    %626 = vmatpush1.msra.mxu0 0.0
    %627 = vmatprep.subr.mxu0 0.0
    %628 = vmatpush1.msra.mxu0 0.0
    %629 = vmatprep.subr.mxu0 0.0
    %630 = vmatpush1.msra.mxu0 0.0
    %631 = vmatprep.subr.mxu0 0.0
    %632 = vmatpush1.msra.mxu0 0.0
    %633 = vmatprep.subr.mxu0 0.0
    %634 = vmatpush1.msra.mxu0 0.0
    %635 = vmatprep.subr.mxu0 0.0
    %636 = vmatpush1.msra.mxu0 0.0
    %637 = vmatprep.subr.mxu0 0.0
    %638 = vmatpush1.msra.mxu0 0.0
    %639 = vmatprep.subr.mxu0 0.0
    %640 = vmatpush1.msra.mxu0 0.0
    %641 = vmatprep.subr.mxu0 0.0
    %642 = vmatpush1.msra.mxu0 0.0
    %643 = vmatprep.subr.mxu0 0.0
    %644 = vmatpush1.msra.mxu0 0.0
    %645 = vmatprep.subr.mxu0 0.0
    %646 = vmatpush1.msra.mxu0 0.0
    %647 = vmatprep.subr.mxu0 0.0
    %648 = vmatpush1.msra.mxu0 0.0
    %649 = vmatprep.subr.mxu0 0.0
    %650 = vmatpush1.msra.mxu0 0.0
    %651 = vmatprep.subr.mxu0 0.0
    %652 = vmatpush1.msra.mxu0 0.0
    %653 = vmatprep.subr.mxu0 0.0
    %654 = vmatpush1.msra.mxu0 0.0
    %655 = vmatprep.subr.mxu0 0.0
    %656 = vmatpush1.msra.mxu0 0.0
    %657 = vmatprep.subr.mxu0 0.0
    %658 = vmatpush1.msra.mxu0 0.0
    %659 = vmatprep.subr.mxu0 0.0
    %660 = vmatpush1.msra.mxu0 0.0
    %661 = vmatprep.subr.mxu0 0.0
    %662 = vmatpush1.msra.mxu0 0.0
    %663 = vmatprep.subr.mxu0 0.0
    %664 = vmatpush1.msra.mxu0 0.0
    %665 = vmatprep.subr.mxu0 0.0
    %666 = vmatpush1.msra.mxu0 0.0
    %667 = vmatprep.subr.mxu0 0.0
    %668 = vmatpush1.msra.mxu0 0.0
    %669 = vmatprep.subr.mxu0 0.0
    %670 = vmatpush1.msra.mxu0 0.0
    %671 = vmatprep.subr.mxu0 0.0
    %672 = vmatpush1.msra.mxu0 0.0
    %673 = vmatprep.subr.mxu0 0.0
    %674 = vmatpush1.msra.mxu0 0.0
    %675 = vmatprep.subr.mxu0 0.0
    %676 = vmatpush1.msra.mxu0 0.0
    %677 = vmatprep.subr.mxu0 0.0
    %678 = vmatpush1.msra.mxu0 0.0
    %679 = vmatprep.subr.mxu0 0.0
    %680 = vmatpush1.msra.mxu0 0.0
    %681 = vmatprep.subr.mxu0 0.0
    %682 = vmatpush1.msra.mxu0 0.0
    %683 = vmatprep.mubr.f32.mxu0 0.0
    %684 = vmatmul.mubr.f32.gmra.mrb[0].mxu0 %v617
    %v685 = vpop.f32.mrb[0].mxu0
    %v686 = vadd.f32 %v613, %v685
    %v687 = vpop.f32.mrb[0].mxu0
    %688 = vdwg.mxu0
    %v689 = vmax.f32 %v686, 0.0
    %691 = vrot.lane.b32.xlu0 %v689, 127
    %v692 = vpop.permute.xlu0 %691
    %694 = vrot.lane.b32.xlu0 %v689, 126
    %v695 = vpop.permute.xlu0 %694
    %v698 = vsel %vm122, %v606, 0
    %700 = vmatprep.subr.mxu0 0.0
    %701 = vmatpush1.msra.mxu0 %v689
    %702 = vmatprep.subr.mxu0 0.0
    %703 = vmatpush1.msra.mxu0 %v692
    %704 = vmatprep.subr.mxu0 0.0
    %705 = vmatpush1.msra.mxu0 %v695
    %706 = vmatprep.subr.mxu0 0.0
    %707 = vmatpush1.msra.mxu0 0.0
    %708 = vmatprep.subr.mxu0 0.0
    %709 = vmatpush1.msra.mxu0 0.0
    %710 = vmatprep.subr.mxu0 0.0
    %711 = vmatpush1.msra.mxu0 0.0
    %712 = vmatprep.subr.mxu0 0.0
    %713 = vmatpush1.msra.mxu0 0.0
    %714 = vmatprep.subr.mxu0 0.0
    %715 = vmatpush1.msra.mxu0 0.0
    %716 = vmatprep.subr.mxu0 0.0
    %717 = vmatpush1.msra.mxu0 0.0
    %718 = vmatprep.subr.mxu0 0.0
    %719 = vmatpush1.msra.mxu0 0.0
    %720 = vmatprep.subr.mxu0 0.0
    %721 = vmatpush1.msra.mxu0 0.0
    %722 = vmatprep.subr.mxu0 0.0
    %723 = vmatpush1.msra.mxu0 0.0
    %724 = vmatprep.subr.mxu0 0.0
    %725 = vmatpush1.msra.mxu0 0.0
    %726 = vmatprep.subr.mxu0 0.0
    %727 = vmatpush1.msra.mxu0 0.0
    %728 = vmatprep.subr.mxu0 0.0
    %729 = vmatpush1.msra.mxu0 0.0
    %730 = vmatprep.subr.mxu0 0.0
    %731 = vmatpush1.msra.mxu0 0.0
    %732 = vmatprep.subr.mxu0 0.0
    %733 = vmatpush1.msra.mxu0 0.0
    %734 = vmatprep.subr.mxu0 0.0
    %735 = vmatpush1.msra.mxu0 0.0
    %736 = vmatprep.subr.mxu0 0.0
    %737 = vmatpush1.msra.mxu0 0.0
    %738 = vmatprep.subr.mxu0 0.0
    %739 = vmatpush1.msra.mxu0 0.0
    %740 = vmatprep.subr.mxu0 0.0
    %741 = vmatpush1.msra.mxu0 0.0
    %742 = vmatprep.subr.mxu0 0.0
    %743 = vmatpush1.msra.mxu0 0.0
    %744 = vmatprep.subr.mxu0 0.0
    %745 = vmatpush1.msra.mxu0 0.0
    %746 = vmatprep.subr.mxu0 0.0
    %747 = vmatpush1.msra.mxu0 0.0
    %748 = vmatprep.subr.mxu0 0.0
    %749 = vmatpush1.msra.mxu0 0.0
    %750 = vmatprep.subr.mxu0 0.0
    %751 = vmatpush1.msra.mxu0 0.0
    %752 = vmatprep.subr.mxu0 0.0
    %753 = vmatpush1.msra.mxu0 0.0
    %754 = vmatprep.subr.mxu0 0.0
    %755 = vmatpush1.msra.mxu0 0.0
    %756 = vmatprep.subr.mxu0 0.0
    %757 = vmatpush1.msra.mxu0 0.0
    %758 = vmatprep.subr.mxu0 0.0
    %759 = vmatpush1.msra.mxu0 0.0
    %760 = vmatprep.subr.mxu0 0.0
    %761 = vmatpush1.msra.mxu0 0.0
    %762 = vmatprep.subr.mxu0 0.0
    %763 = vmatpush1.msra.mxu0 0.0
    %764 = vmatprep.mubr.f32.mxu0 0.0
    %765 = vmatmul.mubr.f32.gmra.mrb[0].mxu0 %v698
    %v766 = vpop.f32.mrb[0].mxu0
    %v767 = vadd.f32 0.0, %v766
    %v768 = vpop.f32.mrb[0].mxu0
    %769 = vdwg.mxu0
    %770 = vset.pattern.permute.xlu0 1
    %771 = vperm.xlu0 %770, %v607
    %v772 = vpop.permute.xlu0 %771
    %vm774 = vcmask 80896
    %v776 = vsel %vm774, %v767, 0
    %v779 = vsel %vm504, %v609, 0
    %781 = vmatprep.subr.mxu0 0.0
    %782 = vmatpush1.msra.mxu0 %v608
    %783 = vmatprep.subr.mxu0 0.0
    %784 = vmatpush1.msra.mxu0 %v779
    %785 = vmatprep.subr.mxu0 0.0
    %786 = vmatpush1.msra.mxu0 0.0
    %787 = vmatprep.subr.mxu0 0.0
    %788 = vmatpush1.msra.mxu0 0.0
    %789 = vmatprep.subr.mxu0 0.0
    %790 = vmatpush1.msra.mxu0 0.0
    %791 = vmatprep.subr.mxu0 0.0
    %792 = vmatpush1.msra.mxu0 0.0
    %793 = vmatprep.subr.mxu0 0.0
    %794 = vmatpush1.msra.mxu0 0.0
    %795 = vmatprep.subr.mxu0 0.0
    %796 = vmatpush1.msra.mxu0 0.0
    %797 = vmatprep.subr.mxu0 0.0
    %798 = vmatpush1.msra.mxu0 0.0
    %799 = vmatprep.subr.mxu0 0.0
    %800 = vmatpush1.msra.mxu0 0.0
    %801 = vmatprep.subr.mxu0 0.0
    %802 = vmatpush1.msra.mxu0 0.0
    %803 = vmatprep.subr.mxu0 0.0
    %804 = vmatpush1.msra.mxu0 0.0
    %805 = vmatprep.subr.mxu0 0.0
    %806 = vmatpush1.msra.mxu0 0.0
    %807 = vmatprep.subr.mxu0 0.0
    %808 = vmatpush1.msra.mxu0 0.0
    %809 = vmatprep.subr.mxu0 0.0
    %810 = vmatpush1.msra.mxu0 0.0
    %811 = vmatprep.subr.mxu0 0.0
    %812 = vmatpush1.msra.mxu0 0.0
    %813 = vmatprep.subr.mxu0 0.0
    %814 = vmatpush1.msra.mxu0 0.0
    %815 = vmatprep.subr.mxu0 0.0
    %816 = vmatpush1.msra.mxu0 0.0
    %817 = vmatprep.subr.mxu0 0.0
    %818 = vmatpush1.msra.mxu0 0.0
    %819 = vmatprep.subr.mxu0 0.0
    %820 = vmatpush1.msra.mxu0 0.0
    %821 = vmatprep.subr.mxu0 0.0
    %822 = vmatpush1.msra.mxu0 0.0
    %823 = vmatprep.subr.mxu0 0.0
    %824 = vmatpush1.msra.mxu0 0.0
    %825 = vmatprep.subr.mxu0 0.0
    %826 = vmatpush1.msra.mxu0 0.0
    %827 = vmatprep.subr.mxu0 0.0
    %828 = vmatpush1.msra.mxu0 0.0
    %829 = vmatprep.subr.mxu0 0.0
    %830 = vmatpush1.msra.mxu0 0.0
    %831 = vmatprep.subr.mxu0 0.0
    %832 = vmatpush1.msra.mxu0 0.0
    %833 = vmatprep.subr.mxu0 0.0
    %834 = vmatpush1.msra.mxu0 0.0
    %835 = vmatprep.subr.mxu0 0.0
    %836 = vmatpush1.msra.mxu0 0.0
    %837 = vmatprep.subr.mxu0 0.0
    %838 = vmatpush1.msra.mxu0 0.0
    %839 = vmatprep.subr.mxu0 0.0
    %840 = vmatpush1.msra.mxu0 0.0
    %841 = vmatprep.subr.mxu0 0.0
    %842 = vmatpush1.msra.mxu0 0.0
    %843 = vmatprep.subr.mxu0 0.0
    %844 = vmatpush1.msra.mxu0 0.0
    %845 = vmatprep.mubr.f32.mxu0 0.0
    %846 = vmatmul.mubr.f32.gmra.mrb[0].mxu0 %v776
    %v847 = vpop.f32.mrb[0].mxu0
    %v848 = vadd.f32 %v772, %v847
    %v849 = vpop.f32.mrb[0].mxu0
    %850 = vdwg.mxu0
    %v851 = vmax.f32 %v848, 0.0
    %852 = vset.pattern.permute.xlu0 2
    %853 = vperm.xlu0 %852, %v607
    %v854 = vpop.permute.xlu0 %853
    %v856 = vmul.f32 %v851, %v854
    %857 = vset.pattern.permute.xlu0 3
    %858 = vperm.xlu0 %857, %v607
    %v859 = vpop.permute.xlu0 %858
    %v861 = vadd.f32 %v856, %v859
    %vm862 = vcmask 24576
    %863 = vst.msk [vmem:[#allocation3] sm:$0x1] %vm862, %v861
    %865 = vrot.lane.b32.xlu0 %v861, 4
    %v866 = vpop.permute.xlu0 %865
    %vm868 = vcmask 58401
    %869 = vst.msk [vmem:[#allocation3 - $0x1] sm:$0x2] %vm868, %v866
    %870 = vrot.lane.b32.xlu0 %v861, 8
    %v871 = vpop.permute.xlu0 %870
    %vm873 = vcmask 92226
    %874 = vst.msk [vmem:[#allocation3 - $0x2] sm:$0x4] %vm873, %v871
    %875 = vrot.lane.b32.xlu0 %v861, 12
    %v876 = vpop.permute.xlu0 %875
    %vm878 = vcmask 126051
    %879 = vst.msk [vmem:[#allocation3 - $0x3] sm:$0x8] %vm878, %v876
    %880 = vrot.lane.b32.xlu0 %v861, 16
    %v881 = vpop.permute.xlu0 %880
    %vm883 = vcmask 159876
    %884 = vst.msk [vmem:[#allocation3 - $0x4] sm:$0x10] %vm883, %v881
    %885 = vrot.lane.b32.xlu0 %v861, 20
    %v886 = vpop.permute.xlu0 %885
    %vm888 = vcmask 193701
    %889 = vst.msk [vmem:[#allocation3 - $0x5] sm:$0x20] %vm888, %v886
    %890 = vrot.lane.b32.xlu0 %v861, 24
    %v891 = vpop.permute.xlu0 %890
    %vm893 = vcmask 227526
    %894 = vst.msk [vmem:[#allocation3 - $0x6] sm:$0x40] %vm893, %v891
    %895 = vrot.lane.b32.xlu0 %v861, 28
    %v896 = vpop.permute.xlu0 %895
    %vm898 = vcmask 261351
    %899 = vst.msk [vmem:[#allocation3 - $0x7] sm:$0x80] %vm898, %v896
    %900 = vrot.lane.b32.xlu0 %v861, 124
    %v901 = vpop.permute.xlu0 %900
    %903 = vst.msk [vmem:[#allocation3 + $0x1] sm:$0x1] %vm862, %v901
    %904 = vst.msk [vmem:[#allocation3] sm:$0x2] %vm868, %v861
    %905 = vst.msk [vmem:[#allocation3 - $0x1] sm:$0x4] %vm873, %v866
    %906 = vst.msk [vmem:[#allocation3 - $0x2] sm:$0x8] %vm878, %v871
    %907 = vst.msk [vmem:[#allocation3 - $0x3] sm:$0x10] %vm883, %v876
    %908 = vst.msk [vmem:[#allocation3 - $0x4] sm:$0x20] %vm888, %v881
    %909 = vst.msk [vmem:[#allocation3 - $0x5] sm:$0x40] %vm893, %v886
    %910 = vst.msk [vmem:[#allocation3 - $0x6] sm:$0x80] %vm898, %v891
    %v911 = vld [vmem:[%s1 + $0xb0] sm:$0xff]
    %v912 = vld [vmem:[%s1 + $0xb8] sm:$0xff]
    %v913 = vld [vmem:[%s1 + $0xc0] sm:$0xff]
    %v914 = vld [vmem:[%s1 + $0xc8] sm:$0xff]
    %v915 = vld [vmem:[%s1 + $0xd0] sm:$0x1]
    %v916 = vld [vmem:[#allocation3] sm:$0x3]
    %v917 = vlaneseq
    %v918 = vshrl.u32 %v917, 7
    %v919 = vsub.s32 0, %v918
    %v920 = vrot.slane %v915, %v919
    %vm921 = vcmask 261120
    %v923 = vsel %vm921, %v916, 0
    %925 = vmatprep.subr.mxu0 0.0
    %926 = vmatpush1.msra.mxu0 %v911
    %927 = vmatprep.subr.mxu0 0.0
    %928 = vmatpush1.msra.mxu0 %v912
    %929 = vmatprep.subr.mxu0 0.0
    %930 = vmatpush1.msra.mxu0 %v913
    %931 = vmatprep.subr.mxu0 0.0
    %932 = vmatpush1.msra.mxu0 %v914
    %933 = vmatprep.subr.mxu0 0.0
    %934 = vmatpush1.msra.mxu0 0.0
    %935 = vmatprep.subr.mxu0 0.0
    %936 = vmatpush1.msra.mxu0 0.0
    %937 = vmatprep.subr.mxu0 0.0
    %938 = vmatpush1.msra.mxu0 0.0
    %939 = vmatprep.subr.mxu0 0.0
    %940 = vmatpush1.msra.mxu0 0.0
    %941 = vmatprep.subr.mxu0 0.0
    %942 = vmatpush1.msra.mxu0 0.0
    %943 = vmatprep.subr.mxu0 0.0
    %944 = vmatpush1.msra.mxu0 0.0
    %945 = vmatprep.subr.mxu0 0.0
    %946 = vmatpush1.msra.mxu0 0.0
    %947 = vmatprep.subr.mxu0 0.0
    %948 = vmatpush1.msra.mxu0 0.0
    %949 = vmatprep.subr.mxu0 0.0
    %950 = vmatpush1.msra.mxu0 0.0
    %951 = vmatprep.subr.mxu0 0.0
    %952 = vmatpush1.msra.mxu0 0.0
    %953 = vmatprep.subr.mxu0 0.0
    %954 = vmatpush1.msra.mxu0 0.0
    %955 = vmatprep.subr.mxu0 0.0
    %956 = vmatpush1.msra.mxu0 0.0
    %957 = vmatprep.subr.mxu0 0.0
    %958 = vmatpush1.msra.mxu0 0.0
    %959 = vmatprep.subr.mxu0 0.0
    %960 = vmatpush1.msra.mxu0 0.0
    %961 = vmatprep.subr.mxu0 0.0
    %962 = vmatpush1.msra.mxu0 0.0
    %963 = vmatprep.subr.mxu0 0.0
    %964 = vmatpush1.msra.mxu0 0.0
    %965 = vmatprep.subr.mxu0 0.0
    %966 = vmatpush1.msra.mxu0 0.0
    %967 = vmatprep.subr.mxu0 0.0
    %968 = vmatpush1.msra.mxu0 0.0
    %969 = vmatprep.subr.mxu0 0.0
    %970 = vmatpush1.msra.mxu0 0.0
    %971 = vmatprep.subr.mxu0 0.0
    %972 = vmatpush1.msra.mxu0 0.0
    %973 = vmatprep.subr.mxu0 0.0
    %974 = vmatpush1.msra.mxu0 0.0
    %975 = vmatprep.subr.mxu0 0.0
    %976 = vmatpush1.msra.mxu0 0.0
    %977 = vmatprep.subr.mxu0 0.0
    %978 = vmatpush1.msra.mxu0 0.0
    %979 = vmatprep.subr.mxu0 0.0
    %980 = vmatpush1.msra.mxu0 0.0
    %981 = vmatprep.subr.mxu0 0.0
    %982 = vmatpush1.msra.mxu0 0.0
    %983 = vmatprep.subr.mxu0 0.0
    %984 = vmatpush1.msra.mxu0 0.0
    %985 = vmatprep.subr.mxu0 0.0
    %986 = vmatpush1.msra.mxu0 0.0
    %987 = vmatprep.subr.mxu0 0.0
    %988 = vmatpush1.msra.mxu0 0.0
    %989 = vmatprep.mubr.f32.mxu0 0.0
    %990 = vmatmul.mubr.f32.gmra.mrb[0].mxu0 %v923
    %v991 = vpop.f32.mrb[0].mxu0
    %v992 = vadd.f32 %v920, %v991
    %v993 = vpop.f32.mrb[0].mxu0
    %994 = vdwg.mxu0
    %vm995 = vcmask 58368
    %996 = vst.msk [vmem:[#allocation4] sm:$0x3] %vm995, %v992
    // Predicated region
    $region10: #{forward.1} parent=1 // pred_check
      _
    $region11: #{forward.1} parent=1 // pred_check_branch
      %998 = sbr.rel (0) target = $region13
    $region12: #{forward.1} parent=1 // pred_region
      %s1000 = ssub.s32 32, 32
      %1001 = vsyncadd [#allocation5], %s1000
      %s1003 = sshll.u32 [#allocation4], 4
      %s1004 = int_to_ptr.vmem [resolvable:$true] %s1003
      %1006 = dma.vmem_to_hbm [thread:$0]  %s1004, 32, %s2, [#allocation5]
    $region13: #{forward.1} parent=1 // pred_fallthru
      _
    // Predicated region
    $region14: #{forward.1} parent=1 // pred_check
      _
    $region15: #{forward.1} parent=1 // pred_check_branch
      %1008 = sbr.rel (0) target = $region17
    $region16: #{forward.1} parent=1 // pred_region
      %1009 = dma.done [#allocation5], 32
    $region17: #{forward.1} parent=1 // pred_fallthru
      _
    %1010 = vsyncpa [#allocation5], 1

</llo_original>
